<compile_context>
chip_gen: v6e
topology: v6e:2x2x1
jax: 0.10.0
libtpu: 0.0.40
codegen_flags: <defaults>
</compile_context>

<pallas_src>
import functools

import jax
import jax.numpy as jnp
from jax.experimental import pallas as pl
from jax.experimental.pallas import tpu as pltpu


def ffn_kernel(x_ref, w1_ref, b1_ref, w2_ref, b2_ref, o_ref, acc_ref):
    # x_ref:  (tm, dmp)    row tile of tokens (constant across k), compute dtype
    # w1_ref: (dmp, tk)    streamed chunk of W1, compute dtype
    # b1_ref: (1, tk)      matching slice of b1, f32
    # w2_ref: (tk, dmp)    streamed chunk of W2, compute dtype
    # b2_ref: (1, dmp)     f32
    # o_ref:  (tm, dmp)    resident output tile (constant across k)
    # acc_ref:(tm, dmp)    f32 VMEM accumulator
    k = pl.program_id(1)

    @pl.when(k == 0)
    def _init():
        acc_ref[...] = jnp.zeros_like(acc_ref)

    # First linear chunk + bias + ReLU (MXU, f32 accumulate).
    h = jnp.dot(x_ref[...], w1_ref[...], preferred_element_type=jnp.float32)
    h = jnp.maximum(h + b1_ref[...], 0.0)
    # Dropout: eval-mode -> identity (see TODO at top).

    # Second linear chunk accumulated into the resident f32 accumulator.
    acc_ref[...] += jnp.dot(h.astype(w2_ref.dtype), w2_ref[...],
                            preferred_element_type=jnp.float32)

    @pl.when(k == pl.num_programs(1) - 1)
    def _finalize():
        o_ref[...] = (acc_ref[...] + b2_ref[...]).astype(o_ref.dtype)


def _round_up(x, m):
    return (x + m - 1) // m * m


def _cdiv(a, b):
    return -(-a // b)


@functools.lru_cache(maxsize=1)
def _physical_vmem_bytes():
    """Per-TensorCore VMEM capacity; conservative fallback fits every gen."""
    try:
        info = pltpu.get_tpu_info()
        vmem = int(getattr(info, "vmem_capacity_bytes", 0))
        if vmem > 0:
            return vmem
    except Exception:
        pass
    return 64 * 1024 * 1024  # safe on v5e/v6e/v7x


def _select_tiles(M, dmp, d_ff, compute_dtype, out_dtype, tm_max, tk_max,
                  vmem_limit):
    """Pick (tm, Mp, n_m, tk, d_ff_p) under a VMEM-derived byte budget."""
    ic = jnp.dtype(compute_dtype).itemsize
    io = jnp.dtype(out_dtype).itemsize
    sublane = max(8, 32 // ic)          # 8 for f32, 16 for bf16, 32 for 8-bit
    tile_budget = int(vmem_limit * 0.8)  # leave headroom for compiler scratch

    # d_ff chunk: full d_ff if small, else stream in tk-sized (128-mult) chunks
    # and zero-pad d_ff up to a multiple of tk (numerically safe).
    if d_ff <= tk_max:
        tk = d_ff
        d_ff_p = d_ff
    else:
        tk = tk_max
        d_ff_p = _round_up(d_ff, tk)

    def tm_cap_for(tk_try):
        fixed = 2 * (dmp * tk_try * ic      # W1 chunk, double-buffered
                     + tk_try * 4           # b1 chunk (f32)
                     + tk_try * dmp * ic    # W2 chunk
                     + dmp * 4)             # b2 (f32)
        per_row = dmp * (2 * ic + 2 * io + 4)  # x tile x2, out tile x2, f32 acc
        return (tile_budget - fixed) // per_row

    # If weight chunks squeeze tm too hard, shrink tk (stays a 128-multiple).
    while tk > 128 and d_ff > tk_max and tm_cap_for(tk) < 128:
        tk //= 2
        d_ff_p = _round_up(d_ff, tk)

    tm_cap = int(max(sublane,
                     min(tm_max, (max(tm_cap_for(tk), sublane) // sublane)
                         * sublane)))
    # Choose n_m first so row padding waste stays small (no M=260 -> 512 cases).
    n_m = _cdiv(M, tm_cap)
    tm = _round_up(_cdiv(M, n_m), sublane)
    Mp = n_m * tm
    return tm, Mp, n_m, tk, d_ff_p


@functools.partial(jax.jit,
                   static_argnames=("compute_dtype", "tm_max", "tk_max"))
def feed_forward(x, w1, b1, w2, b2, *, compute_dtype=jnp.bfloat16,
                 tm_max=1024, tk_max=512):
    """x: [B, S, d_model]; returns [B, S, d_model] (eval-mode FFN)."""
    B, S, d_model = x.shape
    d_ff = w1.shape[1]
    M = B * S
    out_dtype = x.dtype
    cd = jnp.dtype(compute_dtype)

    # Pad d_model to a lane-dense multiple of 128 (unmasked output stores).
    dmp = _round_up(d_model, 128)

    phys_vmem = _physical_vmem_bytes()
    vmem_limit = max(32 * 1024 * 1024,
                     min(int(phys_vmem * 0.85), 128 * 1024 * 1024))

    tm, Mp, n_m, tk, d_ff_p = _select_tiles(
        M, dmp, d_ff, cd, out_dtype, tm_max, tk_max, vmem_limit)
    n_k = d_ff_p // tk

    # Pad (zero) and cast operands.  Zero-padded rows/cols contribute nothing:
    # ReLU(0 + 0) = 0 and zero W2 rows/cols add 0; padded outputs are sliced.
    x2d = x.reshape(M, d_model).astype(cd)
    x2d = jnp.pad(x2d, ((0, Mp - M), (0, dmp - d_model)))
    w1p = jnp.pad(w1.astype(cd), ((0, dmp - d_model), (0, d_ff_p - d_ff)))
    w2p = jnp.pad(w2.astype(cd), ((0, d_ff_p - d_ff), (0, dmp - d_model)))
    b1p = jnp.pad(b1.astype(jnp.float32), (0, d_ff_p - d_ff)).reshape(1, d_ff_p)
    b2p = jnp.pad(b2.astype(jnp.float32), (0, dmp - d_model)).reshape(1, dmp)

    ic = cd.itemsize
    io = jnp.dtype(out_dtype).itemsize
    cost = pl.CostEstimate(
        flops=4 * Mp * dmp * d_ff_p,                       # two matmuls
        transcendentals=0,
        bytes_accessed=(Mp * dmp * (ic + io)               # x in + out
                        + n_m * (w1p.size + w2p.size) * ic  # weights re-streamed
                        + n_m * (b1p.size + b2p.size) * 4))

    out = pl.pallas_call(
        ffn_kernel,
        out_shape=jax.ShapeDtypeStruct((Mp, dmp), out_dtype),
        grid_spec=pltpu.PrefetchScalarGridSpec(
            num_scalar_prefetch=0,
            grid=(n_m, n_k),
            in_specs=[
                pl.BlockSpec((tm, dmp), lambda i, k: (i, 0)),   # x row tile
                pl.BlockSpec((dmp, tk), lambda i, k: (0, k)),   # W1 chunk
                pl.BlockSpec((1, tk), lambda i, k: (0, k)),     # b1 chunk
                pl.BlockSpec((tk, dmp), lambda i, k: (k, 0)),   # W2 chunk
                pl.BlockSpec((1, dmp), lambda i, k: (0, 0)),    # b2
            ],
            out_specs=pl.BlockSpec((tm, dmp), lambda i, k: (i, 0)),
            scratch_shapes=[pltpu.VMEM((tm, dmp), jnp.float32)],
        ),
        compiler_params=pltpu.CompilerParams(
            dimension_semantics=("parallel", "arbitrary"),
            vmem_limit_bytes=vmem_limit),
        cost_estimate=cost,
    )(x2d, w1p, b1p, w2p, b2p)

    out = out[:M, :d_model]
    return out.reshape(B, S, d_model)


def init_params(key, d_model, d_ff, dtype=jnp.float32):
    """Deterministic nn.Linear-style init (uniform in +-1/sqrt(fan_in))."""
    k1, k2, k3, k4 = jax.random.split(key, 4)
    lim1 = 1.0 / (d_model ** 0.5)
    lim2 = 1.0 / (d_ff ** 0.5)
    w1 = jax.random.uniform(k1, (d_model, d_ff), dtype, -lim1, lim1)
    b1 = jax.random.uniform(k2, (d_ff,), dtype, -lim1, lim1)
    w2 = jax.random.uniform(k3, (d_ff, d_model), dtype, -lim2, lim2)
    b2 = jax.random.uniform(k4, (d_model,), dtype, -lim2, lim2)
    return w1, b1, w2, b2


def _reference(x, w1, b1, w2, b2):
    return jnp.maximum(x @ w1 + b1, 0.0) @ w2 + b2


if __name__ == "__main__":
    key = jax.random.PRNGKey(0)

    # Test 1: small demo shapes (single grid step), full-f32 compute.
    B, S, d_model, d_ff = 2, 8, 32, 64
    kx, kp, key = jax.random.split(key, 3)
    x = jax.random.normal(kx, (B, S, d_model), dtype=jnp.float32)
    w1, b1, w2, b2 = init_params(kp, d_model, d_ff)
    out = jax.block_until_ready(
        feed_forward(x, w1, b1, w2, b2, compute_dtype=jnp.float32))
    ref = _reference(x, w1, b1, w2, b2)
    assert out.shape == (B, S, d_model)
    assert jnp.allclose(out, ref, atol=1e-4, rtol=1e-4)

    # Test 2: exercises the streamed d_ff reduction (n_k > 1), d_ff padding
    # (640 -> 768 at tk=256), d_model padding (96 -> 128) and non-divisible M.
    B, S, d_model, d_ff = 2, 65, 96, 640
    kx, kp, key = jax.random.split(key, 3)
    x = jax.random.normal(kx, (B, S, d_model), dtype=jnp.float32)
    w1, b1, w2, b2 = init_params(kp, d_model, d_ff)
    out = jax.block_until_ready(
        feed_forward(x, w1, b1, w2, b2, compute_dtype=jnp.float32, tk_max=256))
    ref = _reference(x, w1, b1, w2, b2)
    assert out.shape == (B, S, d_model)
    assert jnp.allclose(out, ref, atol=2e-3, rtol=2e-3)

    # Test 3: default bf16 compute path (f32 accumulate), same shapes.
    out_bf16 = jax.block_until_ready(
        feed_forward(x, w1, b1, w2, b2, tk_max=256))
    assert out_bf16.shape == (B, S, d_model)
    assert jnp.allclose(out_bf16, ref, atol=3e-2, rtol=3e-2)

    print("KERNEL_OK")
</pallas_src>

<mosaic_0001>
module attributes {stable_mosaic.version = 11 : i64} {
  func.func @ffn_kernel(%arg0: i32, %arg1: i32, %arg2: memref<16x128xf32, #tpu.memory_space<vmem>>, %arg3: memref<128x64xf32, #tpu.memory_space<vmem>>, %arg4: memref<1x64xf32, #tpu.memory_space<vmem>>, %arg5: memref<64x128xf32, #tpu.memory_space<vmem>>, %arg6: memref<1x128xf32, #tpu.memory_space<vmem>>, %arg7: memref<16x128xf32, #tpu.memory_space<vmem>>, %arg8: memref<16x128xf32, #tpu.memory_space<vmem>>) attributes {dimension_semantics = [#tpu.dimension_semantics<parallel>, #tpu.dimension_semantics<arbitrary>], iteration_bounds = array<i64: 1, 1>, scalar_prefetch = 0 : i64, scratch_operands = 1 : i64, tpu.core_type = #tpu.core_type<tc>, window_params = [{transform_indices = @transform_0, window_bounds = array<i64: 16, 128>}, {transform_indices = @transform_1, window_bounds = array<i64: 128, 64>}, {transform_indices = @transform_2, window_bounds = array<i64: 1, 64>}, {transform_indices = @transform_3, window_bounds = array<i64: 64, 128>}, {pipeline_mode = #tpu.pipeline_mode<synchronous>, transform_indices = @transform_4, window_bounds = array<i64: 1, 128>}, {transform_indices = @transform_5, window_bounds = array<i64: 16, 128>}]} {
    %c0_i32 = arith.constant 0 : i32
    %0 = arith.cmpi eq, %arg1, %c0_i32 : i32
    %1 = arith.extui %0 : i1 to i32
    %c0_i32_0 = arith.constant 0 : i32
    %2 = arith.cmpi ne, %1, %c0_i32_0 : i32
    scf.if %2 {
      %cst_16 = arith.constant 0.000000e+00 : f32
      %19 = vector.broadcast %cst_16 : f32 to vector<16x128xf32>
      %c0_17 = arith.constant 0 : index
      %c0_18 = arith.constant 0 : index
      %20 = vector.load %arg8[%c0_17, %c0_18] : memref<16x128xf32, #tpu.memory_space<vmem>>, vector<16x128xf32>
      tpu.vector_store %arg8[%c0_17, %c0_18], %19 {strides = array<i32>} : memref<16x128xf32, #tpu.memory_space<vmem>>, vector<16x128xf32>,
    } else {
    }
    %c0 = arith.constant 0 : index
    %c0_1 = arith.constant 0 : index
    %3 = vector.load %arg2[%c0, %c0_1] : memref<16x128xf32, #tpu.memory_space<vmem>>, vector<16x128xf32>
    %c0_2 = arith.constant 0 : index
    %c0_3 = arith.constant 0 : index
    %4 = vector.load %arg3[%c0_2, %c0_3] : memref<128x64xf32, #tpu.memory_space<vmem>>, vector<128x64xf32>
    %cst = arith.constant dense<0.000000e+00> : vector<16x64xf32>
    %5 = tpu.matmul %3, %4, %cst {dimension_numbers = #tpu.dot_dimension_numbers<[1], [0], [0], [1], [0, 0, 1, 1], [], []>} : vector<16x128xf32>, vector<128x64xf32>, vector<16x64xf32> -> vector<16x64xf32>
    %c0_4 = arith.constant 0 : index
    %c0_5 = arith.constant 0 : index
    %6 = vector.load %arg4[%c0_4, %c0_5] : memref<1x64xf32, #tpu.memory_space<vmem>>, vector<1x64xf32>
    %7 = vector.broadcast %6 : vector<1x64xf32> to vector<16x64xf32>
    %8 = arith.addf %5, %7 : vector<16x64xf32>
    %cst_6 = arith.constant 0.000000e+00 : f32
    %9 = vector.broadcast %cst_6 : f32 to vector<16x64xf32>
    %10 = arith.maximumf %8, %9 : vector<16x64xf32>
    %c0_7 = arith.constant 0 : index
    %c0_8 = arith.constant 0 : index
    %11 = vector.load %arg8[%c0_7, %c0_8] : memref<16x128xf32, #tpu.memory_space<vmem>>, vector<16x128xf32>
    %c0_9 = arith.constant 0 : index
    %c0_10 = arith.constant 0 : index
    %12 = vector.load %arg5[%c0_9, %c0_10] : memref<64x128xf32, #tpu.memory_space<vmem>>, vector<64x128xf32>
    %cst_11 = arith.constant dense<0.000000e+00> : vector<16x128xf32>
    %13 = tpu.matmul %10, %12, %cst_11 {dimension_numbers = #tpu.dot_dimension_numbers<[1], [0], [0], [1], [0, 0, 1, 1], [], []>} : vector<16x64xf32>, vector<64x128xf32>, vector<16x128xf32> -> vector<16x128xf32>
    %14 = arith.addf %11, %13 : vector<16x128xf32>
    %c0_12 = arith.constant 0 : index
    %c0_13 = arith.constant 0 : index
    %15 = vector.load %arg8[%c0_12, %c0_13] : memref<16x128xf32, #tpu.memory_space<vmem>>, vector<16x128xf32>
    tpu.vector_store %arg8[%c0_12, %c0_13], %14 {strides = array<i32>} : memref<16x128xf32, #tpu.memory_space<vmem>>, vector<16x128xf32>,
    %c0_i32_14 = arith.constant 0 : i32
    %16 = arith.cmpi eq, %arg1, %c0_i32_14 : i32
    %17 = arith.extui %16 : i1 to i32
    %c0_i32_15 = arith.constant 0 : i32
    %18 = arith.cmpi ne, %17, %c0_i32_15 : i32
    scf.if %18 {
      %c0_16 = arith.constant 0 : index
      %c0_17 = arith.constant 0 : index
      %19 = vector.load %arg8[%c0_16, %c0_17] : memref<16x128xf32, #tpu.memory_space<vmem>>, vector<16x128xf32>
      %c0_18 = arith.constant 0 : index
      %c0_19 = arith.constant 0 : index
      %20 = vector.load %arg6[%c0_18, %c0_19] : memref<1x128xf32, #tpu.memory_space<vmem>>, vector<1x128xf32>
      %21 = vector.broadcast %20 : vector<1x128xf32> to vector<16x128xf32>
      %22 = arith.addf %19, %21 : vector<16x128xf32>
      %c0_20 = arith.constant 0 : index
      %c0_21 = arith.constant 0 : index
      %23 = vector.load %arg7[%c0_20, %c0_21] : memref<16x128xf32, #tpu.memory_space<vmem>>, vector<16x128xf32>
      tpu.vector_store %arg7[%c0_20, %c0_21], %22 {strides = array<i32>} : memref<16x128xf32, #tpu.memory_space<vmem>>, vector<16x128xf32>,
    } else {
    }
    return
  }
  func.func @transform_0(%arg0: i32, %arg1: i32) -> (i32, i32) {
    %c0_i32 = arith.constant 0 : i32
    %c0_i32_0 = arith.constant 0 : i32
    return %arg0, %c0_i32 : i32, i32
  }
  func.func @transform_1(%arg0: i32, %arg1: i32) -> (i32, i32) {
    %c0_i32 = arith.constant 0 : i32
    %c0_i32_0 = arith.constant 0 : i32
    return %c0_i32, %arg1 : i32, i32
  }
  func.func @transform_2(%arg0: i32, %arg1: i32) -> (i32, i32) {
    %c0_i32 = arith.constant 0 : i32
    %c0_i32_0 = arith.constant 0 : i32
    return %c0_i32, %arg1 : i32, i32
  }
  func.func @transform_3(%arg0: i32, %arg1: i32) -> (i32, i32) {
    %c0_i32 = arith.constant 0 : i32
    %c0_i32_0 = arith.constant 0 : i32
    return %arg1, %c0_i32 : i32, i32
  }
  func.func @transform_4(%arg0: i32, %arg1: i32) -> (i32, i32) {
    %c0_i32 = arith.constant 0 : i32
    %c0_i32_0 = arith.constant 0 : i32
    %c0_i32_1 = arith.constant 0 : i32
    return %c0_i32, %c0_i32_0 : i32, i32
  }
  func.func @transform_5(%arg0: i32, %arg1: i32) -> (i32, i32) {
    %c0_i32 = arith.constant 0 : i32
    %c0_i32_0 = arith.constant 0 : i32
    return %arg0, %c0_i32 : i32, i32
  }
}

</mosaic_0001>

<llo_original>
// kernel: feed_forward.1
$region0: #{feed_forward.1}
  #allocation0 [shape = 'u32[]', space=smem, size = 0x4, offset = 0x4, fixed_abs, tag = 'smem constant byte address 0x4 - core index']
  #allocation1 [shape = 'u32[144,128]{1,0:T(1,128)}', space=vmem, size = 0x12000, scoped, tag = 'internal scratch']
  #allocation2 [shape = 'f32[16,128]{1,0:T(8,128)}', space=vmem, size = 0x2000, scoped, tag = 'scratch operand']
  %s0 = inlined_call_operand.vmem [shape: f32[16,128], index: 0, kind: input, shape index: {}]
  %s1 = inlined_call_operand.vmem [shape: f32[128,64], index: 1, kind: input, shape index: {}]
  %s2 = inlined_call_operand.vmem [shape: f32[1,64], index: 2, kind: input, shape index: {}]
  %s3 = inlined_call_operand.vmem [shape: f32[64,128], index: 3, kind: input, shape index: {}]
  %s4 = inlined_call_operand.vmem [shape: f32[1,128], index: 4, kind: input, shape index: {}]
  %s5 = inlined_call_operand.vmem [shape: f32[16,128], index: 5, kind: output, shape index: {}]
  %s6 = sld [smem:[#allocation0]]
  $region38: #{feed_forward.1} parent=0
    _
  %s8 = ssub.s32 1, %s6
  %s9 = scalar_select 0, %s8, %s6
  // Predicated region
  $region2: #{feed_forward.1} parent=0 // pred_check
    _
  $region3: #{feed_forward.1} parent=0 // pred_check_branch
    %11 = sbr.rel (0) target = $region5
  $region4: #{feed_forward.1} parent=0 // pred_region
    _
  $region5: #{feed_forward.1} parent=0 // pred_fallthru
    _
  // Predicated region
  $region6: #{feed_forward.1} parent=0 // pred_check
    _
  $region7: #{feed_forward.1} parent=0 // pred_check_branch
    %13 = sbr.rel (0) target = $region9
  $region8: #{feed_forward.1} parent=0 // pred_region
    _
  $region9: #{feed_forward.1} parent=0 // pred_fallthru
    _
  // Predicated region
  $region10: #{feed_forward.1} parent=0 // pred_check
    _
  $region11: #{feed_forward.1} parent=0 // pred_check_branch
    %15 = sbr.rel (0) target = $region13
  $region12: #{feed_forward.1} parent=0 // pred_region
    _
  $region13: #{feed_forward.1} parent=0 // pred_fallthru
    _
  // Predicated region
  $region14: #{feed_forward.1} parent=0 // pred_check
    _
  $region15: #{feed_forward.1} parent=0 // pred_check_branch
    %17 = sbr.rel (0) target = $region17
  $region16: #{feed_forward.1} parent=0 // pred_region
    _
  $region17: #{feed_forward.1} parent=0 // pred_fallthru
    _
  // Predicated region
  $region18: #{feed_forward.1} parent=0 // pred_check
    _
  $region19: #{feed_forward.1} parent=0 // pred_check_branch
    %19 = sbr.rel (0) target = $region21
  $region20: #{feed_forward.1} parent=0 // pred_region
    _
  $region21: #{feed_forward.1} parent=0 // pred_fallthru
    _
  %p20 = scmp.eq.s32.totalorder 0, 0
  // Predicated region
  $region22: #{feed_forward.1} parent=0 // pred_check
    %p21 = pneg %p20
  $region23: #{feed_forward.1} parent=0 // pred_check_branch
    %23 = sbr.rel (%p21) target = $region25
  $region24: #{feed_forward.1} parent=0 // pred_region
    %24 = vst [vmem:[#allocation2] sm:$0xff] 0.0
    %25 = vst [vmem:[#allocation2 + $0x8] sm:$0xff] 0.0
  $region25: #{feed_forward.1} parent=0 // pred_fallthru
    _
  %v26 = vld [vmem:[%s0] sm:$0xff]
  %v27 = vld [vmem:[%s0 + $0x8] sm:$0xff]
  %v28 = vld [vmem:[%s1] sm:$0xff]
  %v29 = vld [vmem:[%s1 + $0x8] sm:$0xff]
  %v30 = vld [vmem:[%s1 + $0x10] sm:$0xff]
  %v31 = vld [vmem:[%s1 + $0x18] sm:$0xff]
  %v32 = vld [vmem:[%s1 + $0x20] sm:$0xff]
  %v33 = vld [vmem:[%s1 + $0x28] sm:$0xff]
  %v34 = vld [vmem:[%s1 + $0x30] sm:$0xff]
  %v35 = vld [vmem:[%s1 + $0x38] sm:$0xff]
  %v36 = vld [vmem:[%s1 + $0x40] sm:$0xff]
  %v37 = vld [vmem:[%s1 + $0x48] sm:$0xff]
  %v38 = vld [vmem:[%s1 + $0x50] sm:$0xff]
  %v39 = vld [vmem:[%s1 + $0x58] sm:$0xff]
  %v40 = vld [vmem:[%s1 + $0x60] sm:$0xff]
  %v41 = vld [vmem:[%s1 + $0x68] sm:$0xff]
  %v42 = vld [vmem:[%s1 + $0x70] sm:$0xff]
  %v43 = vld [vmem:[%s1 + $0x78] sm:$0xff]
  %v44 = vld [vmem:[%s2] sm:$0x1]
  %v46 = vlaneseq
  %v47 = vshrl.u32 %v46, 7
  %v48 = vsub.s32 0, %v47
  %v49 = vrot.slane %v44, %v48
  %51 = vmatprep.subr.mxu0 0.0
  %52 = vmatpush1.msra.mxu0 %v43
  %53 = vmatprep.subr.mxu0 0.0
  %54 = vmatpush1.msra.mxu0 %v42
  %55 = vmatprep.subr.mxu0 0.0
  %56 = vmatpush1.msra.mxu0 %v41
  %57 = vmatprep.subr.mxu0 0.0
  %58 = vmatpush1.msra.mxu0 %v40
  %59 = vmatprep.subr.mxu0 0.0
  %60 = vmatpush1.msra.mxu0 %v39
  %61 = vmatprep.subr.mxu0 0.0
  %62 = vmatpush1.msra.mxu0 %v38
  %63 = vmatprep.subr.mxu0 0.0
  %64 = vmatpush1.msra.mxu0 %v37
  %65 = vmatprep.subr.mxu0 0.0
  %66 = vmatpush1.msra.mxu0 %v36
  %67 = vmatprep.subr.mxu0 0.0
  %68 = vmatpush1.msra.mxu0 %v35
  %69 = vmatprep.subr.mxu0 0.0
  %70 = vmatpush1.msra.mxu0 %v34
  %71 = vmatprep.subr.mxu0 0.0
  %72 = vmatpush1.msra.mxu0 %v33
  %73 = vmatprep.subr.mxu0 0.0
  %74 = vmatpush1.msra.mxu0 %v32
  %75 = vmatprep.subr.mxu0 0.0
  %76 = vmatpush1.msra.mxu0 %v31
  %77 = vmatprep.subr.mxu0 0.0
  %78 = vmatpush1.msra.mxu0 %v30
  %79 = vmatprep.subr.mxu0 0.0
  %80 = vmatpush1.msra.mxu0 %v29
  %81 = vmatprep.subr.mxu0 0.0
  %82 = vmatpush1.msra.mxu0 %v28
  %83 = vmatprep.subr.mxu0 0.0
  %84 = vmatpush2.msra.mxu0 0.0
  %85 = vmatprep.subr.mxu0 0.0
  %86 = vmatpush2.msra.mxu0 0.0
  %87 = vmatprep.subr.mxu0 0.0
  %88 = vmatpush2.msra.mxu0 0.0
  %89 = vmatprep.subr.mxu0 0.0
  %90 = vmatpush2.msra.mxu0 0.0
  %91 = vmatprep.subr.mxu0 0.0
  %92 = vmatpush2.msra.mxu0 0.0
  %93 = vmatprep.subr.mxu0 0.0
  %94 = vmatpush2.msra.mxu0 0.0
  %95 = vmatprep.subr.mxu0 0.0
  %96 = vmatpush2.msra.mxu0 0.0
  %97 = vmatprep.subr.mxu0 0.0
  %98 = vmatpush2.msra.mxu0 0.0
  %99 = vmatprep.subr.mxu0 0.0
  %100 = vmatpush2.msra.mxu0 0.0
  %101 = vmatprep.subr.mxu0 0.0
  %102 = vmatpush2.msra.mxu0 0.0
  %103 = vmatprep.subr.mxu0 0.0
  %104 = vmatpush2.msra.mxu0 0.0
  %105 = vmatprep.subr.mxu0 0.0
  %106 = vmatpush2.msra.mxu0 0.0
  %107 = vmatprep.subr.mxu0 0.0
  %108 = vmatpush2.msra.mxu0 0.0
  %109 = vmatprep.subr.mxu0 0.0
  %110 = vmatpush2.msra.mxu0 0.0
  %111 = vmatprep.subr.mxu0 0.0
  %112 = vmatpush2.msra.mxu0 0.0
  %113 = vmatprep.subr.mxu0 0.0
  %114 = vmatpush2.msra.mxu0 0.0
  %115 = vmatprep.mubr.f32.mxu0 0.0
  %116 = vmatmul.mubr.f32.gmra.mxu0 %v26
  %v117 = vpop.f32.mrf.mxu0
  %v118 = vadd.f32 %v49, %v117
  %v119 = vpop.f32.mrf.mxu0
  %120 = vmatprep.mubr.f32.mxu0 0.0
  %121 = vmatmul.mubr.f32.gmra.mxu0 %v27
  %v122 = vpop.f32.mrf.mxu0
  %v123 = vadd.f32 %v49, %v122
  %v124 = vpop.f32.mrf.mxu0
  %125 = vdwg.mxu0
  %v126 = vmax.f32 %v118, 0.0
  %v127 = vmax.f32 %v123, 0.0
  %v128 = vld [vmem:[#allocation2] sm:$0xff]
  %v129 = vld [vmem:[#allocation2 + $0x8] sm:$0xff]
  %v130 = vld [vmem:[%s3] sm:$0xff]
  %v131 = vld [vmem:[%s3 + $0x8] sm:$0xff]
  %v132 = vld [vmem:[%s3 + $0x10] sm:$0xff]
  %v133 = vld [vmem:[%s3 + $0x18] sm:$0xff]
  %v134 = vld [vmem:[%s3 + $0x20] sm:$0xff]
  %v135 = vld [vmem:[%s3 + $0x28] sm:$0xff]
  %v136 = vld [vmem:[%s3 + $0x30] sm:$0xff]
  %v137 = vld [vmem:[%s3 + $0x38] sm:$0xff]
  %vm138 = vcmask 523264
  %v140 = vsel %vm138, %v126, 0
  %v143 = vsel %vm138, %v127, 0
  %145 = vmatprep.subr.mxu0 0.0
  %146 = vmatpush1.msra.mxu0 0.0
  %147 = vmatprep.subr.mxu0 0.0
  %148 = vmatpush1.msra.mxu0 0.0
  %149 = vmatprep.subr.mxu0 0.0
  %150 = vmatpush1.msra.mxu0 0.0
  %151 = vmatprep.subr.mxu0 0.0
  %152 = vmatpush1.msra.mxu0 0.0
  %153 = vmatprep.subr.mxu0 0.0
  %154 = vmatpush1.msra.mxu0 0.0
  %155 = vmatprep.subr.mxu0 0.0
  %156 = vmatpush1.msra.mxu0 0.0
  %157 = vmatprep.subr.mxu0 0.0
  %158 = vmatpush1.msra.mxu0 0.0
  %159 = vmatprep.subr.mxu0 0.0
  %160 = vmatpush1.msra.mxu0 0.0
  %161 = vmatprep.subr.mxu0 0.0
  %162 = vmatpush1.msra.mxu0 %v137
  %163 = vmatprep.subr.mxu0 0.0
  %164 = vmatpush1.msra.mxu0 %v136
  %165 = vmatprep.subr.mxu0 0.0
  %166 = vmatpush1.msra.mxu0 %v135
  %167 = vmatprep.subr.mxu0 0.0
  %168 = vmatpush1.msra.mxu0 %v134
  %169 = vmatprep.subr.mxu0 0.0
  %170 = vmatpush1.msra.mxu0 %v133
  %171 = vmatprep.subr.mxu0 0.0
  %172 = vmatpush1.msra.mxu0 %v132
  %173 = vmatprep.subr.mxu0 0.0
  %174 = vmatpush1.msra.mxu0 %v131
  %175 = vmatprep.subr.mxu0 0.0
  %176 = vmatpush1.msra.mxu0 %v130
  %177 = vmatprep.subr.mxu0 0.0
  %178 = vmatpush2.msra.mxu0 0.0
  %179 = vmatprep.subr.mxu0 0.0
  %180 = vmatpush2.msra.mxu0 0.0
  %181 = vmatprep.subr.mxu0 0.0
  %182 = vmatpush2.msra.mxu0 0.0
  %183 = vmatprep.subr.mxu0 0.0
  %184 = vmatpush2.msra.mxu0 0.0
  %185 = vmatprep.subr.mxu0 0.0
  %186 = vmatpush2.msra.mxu0 0.0
  %187 = vmatprep.subr.mxu0 0.0
  %188 = vmatpush2.msra.mxu0 0.0
  %189 = vmatprep.subr.mxu0 0.0
  %190 = vmatpush2.msra.mxu0 0.0
  %191 = vmatprep.subr.mxu0 0.0
  %192 = vmatpush2.msra.mxu0 0.0
  %193 = vmatprep.subr.mxu0 0.0
  %194 = vmatpush2.msra.mxu0 0.0
  %195 = vmatprep.subr.mxu0 0.0
  %196 = vmatpush2.msra.mxu0 0.0
  %197 = vmatprep.subr.mxu0 0.0
  %198 = vmatpush2.msra.mxu0 0.0
  %199 = vmatprep.subr.mxu0 0.0
  %200 = vmatpush2.msra.mxu0 0.0
  %201 = vmatprep.subr.mxu0 0.0
  %202 = vmatpush2.msra.mxu0 0.0
  %203 = vmatprep.subr.mxu0 0.0
  %204 = vmatpush2.msra.mxu0 0.0
  %205 = vmatprep.subr.mxu0 0.0
  %206 = vmatpush2.msra.mxu0 0.0
  %207 = vmatprep.subr.mxu0 0.0
  %208 = vmatpush2.msra.mxu0 0.0
  %209 = vmatprep.mubr.f32.mxu0 0.0
  %210 = vmatmul.mubr.f32.gmra.mxu0 %v140
  %v211 = vpop.f32.mrf.mxu0
  %v212 = vadd.f32 0.0, %v211
  %v213 = vpop.f32.mrf.mxu0
  %214 = vmatprep.mubr.f32.mxu0 0.0
  %215 = vmatmul.mubr.f32.gmra.mxu0 %v143
  %v216 = vpop.f32.mrf.mxu0
  %v217 = vadd.f32 0.0, %v216
  %v218 = vpop.f32.mrf.mxu0
  %219 = vdwg.mxu0
  %v220 = vadd.f32 %v128, %v212
  %v221 = vadd.f32 %v129, %v217
  %222 = vst [vmem:[#allocation2] sm:$0xff] %v220
  %223 = vst [vmem:[#allocation2 + $0x8] sm:$0xff] %v221
  // Predicated region
  $region26: #{feed_forward.1} parent=0 // pred_check
    %p224 = pneg %p20
  $region27: #{feed_forward.1} parent=0 // pred_check_branch
    %226 = sbr.rel (%p224) target = $region29
  $region28: #{feed_forward.1} parent=0 // pred_region
    %v227 = vld [vmem:[#allocation2] sm:$0xff]
    %v228 = vld [vmem:[#allocation2 + $0x8] sm:$0xff]
    %v229 = vld [vmem:[%s4] sm:$0x1]
    %v231 = vlaneseq
    %v232 = vshrl.u32 %v231, 7
    %v233 = vsub.s32 0, %v232
    %v234 = vrot.slane %v229, %v233
    %v236 = vadd.f32 %v227, %v234
    %v237 = vadd.f32 %v228, %v234
    %238 = vst [vmem:[%s5] sm:$0xff] %v236
    %239 = vst [vmem:[%s5 + $0x8] sm:$0xff] %v237
  $region29: #{feed_forward.1} parent=0 // pred_fallthru
    _
  // Predicated region
  $region30: #{feed_forward.1} parent=0 // pred_check
    _
  $region31: #{feed_forward.1} parent=0 // pred_check_branch
    %241 = sbr.rel (0) target = $region33
  $region32: #{feed_forward.1} parent=0 // pred_region
    _
  $region33: #{feed_forward.1} parent=0 // pred_fallthru
    _
  // Predicated region
  $region34: #{feed_forward.1} parent=0 // pred_check
    _
  $region35: #{feed_forward.1} parent=0 // pred_check_branch
    %243 = sbr.rel (0) target = $region37
  $region36: #{feed_forward.1} parent=0 // pred_region
    _
  $region37: #{feed_forward.1} parent=0 // pred_fallthru
    _

</llo_original>
